<compile_context>
chip_gen: v6e
topology: v6e:2x2x1
jax: 0.10.0
libtpu: 0.0.40
codegen_flags: <defaults>
</compile_context>

<pallas_src>
import functools

import jax
import jax.numpy as jnp
import numpy as np
from jax.experimental import pallas as pl
from jax.experimental.pallas import tpu as pltpu


def _round_up(x, m):
    return ((x + m - 1) // m) * m


def _vmem_limit_bytes():
    """Generation-aware VMEM budget (headroom under the physical capacity)."""
    try:
        cap = int(pltpu.get_tpu_info().vmem_capacity_bytes)
    except Exception:
        cap = 64 * 1024 * 1024  # conservative (v7x-sized) fallback
    return max(32 * 1024 * 1024, min(cap * 7 // 8, 112 * 1024 * 1024))


def _choose_node_tiles(N, min_align):
    """Return (Np, tm, tk): padded node count, row tile, reduction tile.

    Large tk amortizes per-grid-step overhead; tilings that divide N exactly
    avoid a full B*N^2 pad copy of the adjacency before the kernel.
    """
    n_small = _round_up(N, min_align)
    if n_small <= 1024:
        return n_small, n_small, n_small          # single tile, single k step
    candidates = ((256, 1024), (256, 512), (512, 512), (256, 256),
                  (128, 512), (128, 256), (128, 128))
    for tm, tk in candidates:                      # prefer: no node padding
        if N % tm == 0 and N % tk == 0:
            return N, tm, tk
    best = None
    for tm, tk in candidates:                      # else: minimal padding
        Np = _round_up(N, max(tm, tk))
        if best is None or Np - N < best[0]:
            best = (Np - N, Np, tm, tk)
    return best[1], best[2], best[3]


def _resident_support_fits(Np, Fp, tm, tk, adj_bytes, s_bytes, out_bytes,
                           vmem_limit):
    need = (2 * Np * Fp * s_bytes       # resident support slab (double-buffered)
            + 2 * tm * tk * adj_bytes   # adjacency tiles
            + 2 * tm * Fp * out_bytes   # output tiles
            + tm * Fp * 4               # possible f32 accumulator scratch
            + 2 * Fp * 4)               # bias
    return need <= int(vmem_limit * 0.9)


# ---------------------------------------------------------------------------
# Kernel 1: per-row-tile feature matmul  out[m] = x[m] @ W  (+ bias, ReLU)
# ---------------------------------------------------------------------------
def _feature_matmul_kernel(*refs, apply_epilogue, compute_dtype):
    x_ref, w_ref = refs[0], refs[1]
    if apply_epilogue:
        b_ref, o_ref = refs[2], refs[3]
    else:
        o_ref = refs[2]
    x = x_ref[...].astype(compute_dtype)            # (TM, F_in)
    w = w_ref[...].astype(compute_dtype)            # (F_in, Fp)
    out = jnp.dot(x, w, preferred_element_type=jnp.float32)
    if apply_epilogue:
        out = jnp.maximum(out + b_ref[...], 0.0)     # f32 bias add + ReLU
    o_ref[...] = out.astype(o_ref.dtype)


def _feature_matmul(x, w, bias2d, *, apply_epilogue, compute_dtype, out_dtype,
                    tm, vmem_limit):
    B, Np, Fin = x.shape
    Fp = w.shape[1]
    kernel = functools.partial(_feature_matmul_kernel,
                               apply_epilogue=apply_epilogue,
                               compute_dtype=compute_dtype)
    in_specs = [
        pl.BlockSpec((pl.Squeezed(), tm, Fin), lambda b, m: (b, m, 0)),
        pl.BlockSpec((Fin, Fp), lambda b, m: (0, 0)),     # W resident in VMEM
    ]
    args = [x, w]
    if apply_epilogue:
        in_specs.append(pl.BlockSpec((1, Fp), lambda b, m: (0, 0)))
        args.append(bias2d)
    return pl.pallas_call(
        kernel,
        out_shape=jax.ShapeDtypeStruct((B, Np, Fp), out_dtype),
        grid_spec=pltpu.PrefetchScalarGridSpec(
            num_scalar_prefetch=0,
            grid=(B, Np // tm),
            in_specs=in_specs,
            out_specs=pl.BlockSpec((pl.Squeezed(), tm, Fp), lambda b, m: (b, m, 0)),
        ),
        compiler_params=pltpu.CompilerParams(
            dimension_semantics=("parallel", "parallel"),
            vmem_limit_bytes=vmem_limit,
        ),
    )(*args)


# ---------------------------------------------------------------------------
# Kernel 2: tiled adjacency aggregation  out[m] = sum_k adj[m, k] @ s[k]
#   - support optionally VMEM-resident per batch (k-tile sliced in-kernel)
#   - f32 outputs accumulate in-place in the resident output block
#   - optional bias + ReLU epilogue on the last k step
# ---------------------------------------------------------------------------
def _aggregate_kernel(*refs, apply_epilogue, compute_dtype, tk, s_resident,
                      acc_in_out):
    adj_ref, s_ref = refs[0], refs[1]
    idx = 2
    if apply_epilogue:
        b_ref = refs[idx]
        idx += 1
    o_ref = refs[idx]
    idx += 1
    acc_ref = o_ref if acc_in_out else refs[idx]

    k = pl.program_id(2)

    @pl.when(k == 0)
    def _init():
        acc_ref[...] = jnp.zeros_like(acc_ref)

    a = adj_ref[...].astype(compute_dtype)           # (TM, TK), cast on-chip
    if s_resident:
        off = pl.multiple_of(k * tk, tk)
        s = s_ref[pl.ds(off, tk), :]                 # slice resident slab
    else:
        s = s_ref[...]
    s = s.astype(compute_dtype)                      # (TK, Fp)

    acc_ref[...] += jnp.dot(a, s,
                            preferred_element_type=jnp.float32).astype(acc_ref.dtype)

    if apply_epilogue or not acc_in_out:
        @pl.when(k == pl.num_programs(2) - 1)
        def _finalize():
            out = acc_ref[...].astype(jnp.float32)
            if apply_epilogue:
                out = jnp.maximum(out + b_ref[...], 0.0)
            o_ref[...] = out.astype(o_ref.dtype)


def _aggregate(adj, s, bias2d, *, apply_epilogue, compute_dtype, out_dtype,
               tm, tk, s_resident, vmem_limit):
    B, Np, _ = adj.shape
    Fp = s.shape[2]
    acc_in_out = np.dtype(out_dtype) == np.dtype(jnp.float32)

    kernel = functools.partial(_aggregate_kernel,
                               apply_epilogue=apply_epilogue,
                               compute_dtype=compute_dtype,
                               tk=tk,
                               s_resident=s_resident,
                               acc_in_out=acc_in_out)

    in_specs = [pl.BlockSpec((pl.Squeezed(), tm, tk), lambda b, m, k: (b, m, k))]
    if s_resident:
        # Whole-batch support slab resident in VMEM: read from HBM once per b.
        in_specs.append(
            pl.BlockSpec((pl.Squeezed(), Np, Fp), lambda b, m, k: (b, 0, 0)))
    else:
        in_specs.append(
            pl.BlockSpec((pl.Squeezed(), tk, Fp), lambda b, m, k: (b, k, 0)))
    args = [adj, s]
    if apply_epilogue:
        in_specs.append(pl.BlockSpec((1, Fp), lambda b, m, k: (0, 0)))
        args.append(bias2d)

    scratch_shapes = [] if acc_in_out else [pltpu.VMEM((tm, Fp), jnp.float32)]

    return pl.pallas_call(
        kernel,
        out_shape=jax.ShapeDtypeStruct((B, Np, Fp), out_dtype),
        grid_spec=pltpu.PrefetchScalarGridSpec(
            num_scalar_prefetch=0,
            grid=(B, Np // tm, Np // tk),            # reduction axis (k) last
            in_specs=in_specs,
            out_specs=pl.BlockSpec((pl.Squeezed(), tm, Fp),
                                   lambda b, m, k: (b, m, 0)),
            scratch_shapes=scratch_shapes,
        ),
        compiler_params=pltpu.CompilerParams(
            dimension_semantics=("parallel", "parallel", "arbitrary"),
            vmem_limit_bytes=vmem_limit,
        ),
    )(*args)


def graph_conv_layer(x, adj, weight, bias, *, compute_dtype=jnp.float32,
                     node_tiles=None, resident_support=None):
    """Pallas GraphConvLayer.forward: relu(adj @ (x @ W) + bias).

    compute_dtype: dtype fed to the MXU (f32 exact, bf16 fast); accumulation,
    bias add and ReLU stay f32.  adj/x are kept in their HBM dtype and cast
    on-chip.  node_tiles / resident_support are overrides for testing.
    """
    B, N, F_in = x.shape
    F_out = weight.shape[1]
    out_dtype = x.dtype
    vmem_limit = _vmem_limit_bytes()

    min_align = 16 if np.dtype(compute_dtype).itemsize < 4 else 8
    if node_tiles is None:
        Np, tm, tk = _choose_node_tiles(N, min_align)
    else:
        tm, tk = node_tiles
        Np = _round_up(N, max(tm, tk))
    pad_n = Np - N

    Fin_p = _round_up(F_in, 128)
    Fout_p = _round_up(F_out, 128)

    # No wrapper-side dtype cast of adj / x (cast happens on the VPU in-kernel);
    # pad only when the tiling actually requires it.
    adj_p = jnp.pad(adj, ((0, 0), (0, pad_n), (0, pad_n))) if pad_n else adj
    b_p = jnp.pad(bias.astype(jnp.float32), (0, Fout_p - F_out)).reshape(1, Fout_p)

    # Reorder to (adj @ x) @ W only when it shrinks the *padded* feature width.
    reorder = Fin_p < Fout_p

    if not reorder:
        # Standard GCN order: out = adj @ (x @ W).
        x_p = jnp.pad(x, ((0, 0), (0, pad_n), (0, 0))) if pad_n else x
        w_p = jnp.pad(weight, ((0, 0), (0, Fout_p - F_out)))
        support = _feature_matmul(
            x_p, w_p, None, apply_epilogue=False, compute_dtype=compute_dtype,
            out_dtype=compute_dtype, tm=tm, vmem_limit=vmem_limit)
        if resident_support is None:
            res = _resident_support_fits(
                Np, Fout_p, tm, tk, np.dtype(adj_p.dtype).itemsize,
                np.dtype(compute_dtype).itemsize, np.dtype(out_dtype).itemsize,
                vmem_limit)
        else:
            res = resident_support
        out_p = _aggregate(
            adj_p, support, b_p, apply_epilogue=True,
            compute_dtype=compute_dtype, out_dtype=out_dtype,
            tm=tm, tk=tk, s_resident=res, vmem_limit=vmem_limit)
    else:
        # Cheaper order for skewed padded widths: out = (adj @ x) @ W.
        x_p = jnp.pad(x, ((0, 0), (0, pad_n), (0, Fin_p - F_in)))
        w_p = jnp.pad(weight, ((0, Fin_p - F_in), (0, Fout_p - F_out)))
        if resident_support is None:
            res = _resident_support_fits(
                Np, Fin_p, tm, tk, np.dtype(adj_p.dtype).itemsize,
                np.dtype(x_p.dtype).itemsize,
                np.dtype(compute_dtype).itemsize, vmem_limit)
        else:
            res = resident_support
        h = _aggregate(
            adj_p, x_p, None, apply_epilogue=False,
            compute_dtype=compute_dtype, out_dtype=compute_dtype,
            tm=tm, tk=tk, s_resident=res, vmem_limit=vmem_limit)
        out_p = _feature_matmul(
            h, w_p, b_p, apply_epilogue=True, compute_dtype=compute_dtype,
            out_dtype=out_dtype, tm=tm, vmem_limit=vmem_limit)

    return out_p[:, :N, :F_out]


if __name__ == "__main__":
    key = jax.random.PRNGKey(0)
    k1, k2, k3, k4 = jax.random.split(key, 4)

    def reference(x_, adj_, w_, b_):
        return jnp.maximum(jnp.einsum("bij,bjf->bif", adj_, x_ @ w_) + b_, 0.0)

    # Small shapes consistent with the module: batch=2, nodes=8, features 32->32.
    B, N, F_in, F_out = 2, 8, 32, 32
    x = jax.random.normal(k1, (B, N, F_in), dtype=jnp.float32)
    adj = jax.random.uniform(k2, (B, N, N), dtype=jnp.float32)
    bound = 1.0 / jnp.sqrt(jnp.float32(F_in))
    weight = jax.random.uniform(k3, (F_in, F_out), jnp.float32,
                                minval=-bound, maxval=bound)
    bias = 0.1 * jax.random.normal(k4, (F_out,), dtype=jnp.float32)
    ref = reference(x, adj, weight, bias)

    # 1) exact f32 MXU path (in-place f32 output accumulation).
    out = jax.block_until_ready(graph_conv_layer(x, adj, weight, bias))
    assert out.shape == (B, N, F_out)
    assert jnp.allclose(out, ref, atol=1e-5, rtol=1e-5), "f32 path mismatch"

    # 2) bf16 MXU operands (cast on-chip; adj stays f32 in HBM), f32 accumulation.
    out_bf16 = jax.block_until_ready(
        graph_conv_layer(x, adj, weight, bias, compute_dtype=jnp.bfloat16))
    assert jnp.allclose(out_bf16, ref, atol=1e-1, rtol=5e-2), "bf16 path mismatch"

    # 3) skewed padded widths (128 vs 256) exercises the (adj @ x) @ W order.
    F_in2, F_out2 = 32, 256
    x2 = jax.random.normal(k1, (B, N, F_in2), dtype=jnp.float32)
    w2 = jax.random.uniform(k3, (F_in2, F_out2), jnp.float32,
                            minval=-0.2, maxval=0.2)
    b2 = 0.1 * jax.random.normal(k4, (F_out2,), dtype=jnp.float32)
    out2 = jax.block_until_ready(graph_conv_layer(x2, adj, w2, b2))
    ref2 = reference(x2, adj, w2, b2)
    assert jnp.allclose(out2, ref2, atol=1e-4, rtol=1e-4), "reordered path mismatch"

    # 4) multi-tile reduction with VMEM-resident support (forced 128x128 tiles).
    N3, F3 = 256, 64
    x3 = jax.random.normal(k1, (B, N3, F3), dtype=jnp.float32)
    adj3 = jax.random.uniform(k2, (B, N3, N3), dtype=jnp.float32)
    w3 = jax.random.uniform(k3, (F3, F3), jnp.float32, minval=-0.1, maxval=0.1)
    b3 = 0.1 * jax.random.normal(k4, (F3,), dtype=jnp.float32)
    ref3 = reference(x3, adj3, w3, b3)
    out3 = jax.block_until_ready(
        graph_conv_layer(x3, adj3, w3, b3, node_tiles=(128, 128),
                         resident_support=True))
    assert jnp.allclose(out3, ref3, atol=1e-4, rtol=1e-4), "resident path mismatch"

    # 5) same shapes through the tiled (non-resident) support fallback.
    out3b = jax.block_until_ready(
        graph_conv_layer(x3, adj3, w3, b3, node_tiles=(128, 128),
                         resident_support=False))
    assert jnp.allclose(out3b, ref3, atol=1e-4, rtol=1e-4), "tiled-support mismatch"

    print("KERNEL_OK")
</pallas_src>

<mosaic_0001>
module attributes {stable_mosaic.version = 11 : i64} {
  func.func @_feature_matmul_kernel(%arg0: i32, %arg1: i32, %arg2: memref<1x8x32xf32, #tpu.memory_space<vmem>>, %arg3: memref<32x128xf32, #tpu.memory_space<vmem>>, %arg4: memref<1x8x128xf32, #tpu.memory_space<vmem>>) attributes {dimension_semantics = [#tpu.dimension_semantics<parallel>, #tpu.dimension_semantics<parallel>], iteration_bounds = array<i64: 2, 1>, scalar_prefetch = 0 : i64, scratch_operands = 0 : i64, tpu.core_type = #tpu.core_type<tc>, window_params = [{transform_indices = @transform_0, window_bounds = array<i64: 1, 8, 32>}, {pipeline_mode = #tpu.pipeline_mode<synchronous>, transform_indices = @transform_1, window_bounds = array<i64: 32, 128>}, {transform_indices = @transform_2, window_bounds = array<i64: 1, 8, 128>}]} {
    %c0 = arith.constant 0 : index
    %c0_0 = arith.constant 0 : index
    %c0_1 = arith.constant 0 : index
    %0 = vector.load %arg2[%c0, %c0_0, %c0_1] : memref<1x8x32xf32, #tpu.memory_space<vmem>>, vector<1x8x32xf32>
    %1 = vector.shape_cast %0 : vector<1x8x32xf32> to vector<8x32xf32>
    %c0_2 = arith.constant 0 : index
    %c0_3 = arith.constant 0 : index
    %2 = vector.load %arg3[%c0_2, %c0_3] : memref<32x128xf32, #tpu.memory_space<vmem>>, vector<32x128xf32>
    %cst = arith.constant dense<0.000000e+00> : vector<8x128xf32>
    %3 = tpu.matmul %1, %2, %cst {dimension_numbers = #tpu.dot_dimension_numbers<[1], [0], [0], [1], [0, 0, 1, 1], [], []>} : vector<8x32xf32>, vector<32x128xf32>, vector<8x128xf32> -> vector<8x128xf32>
    %c0_4 = arith.constant 0 : index
    %c0_5 = arith.constant 0 : index
    %c0_6 = arith.constant 0 : index
    %4 = vector.load %arg4[%c0_4, %c0_5, %c0_6] : memref<1x8x128xf32, #tpu.memory_space<vmem>>, vector<1x8x128xf32>
    %5 = vector.shape_cast %4 : vector<1x8x128xf32> to vector<8x128xf32>
    %6 = vector.shape_cast %3 : vector<8x128xf32> to vector<1x8x128xf32>
    tpu.vector_store %arg4[%c0_4, %c0_5, %c0_6], %6 {strides = array<i32>} : memref<1x8x128xf32, #tpu.memory_space<vmem>>, vector<1x8x128xf32>,
    return
  }
  func.func @transform_0(%arg0: i32, %arg1: i32) -> (i32, i32, i32) {
    %c0_i32 = arith.constant 0 : i32
    %c0_i32_0 = arith.constant 0 : i32
    return %arg0, %arg1, %c0_i32 : i32, i32, i32
  }
  func.func @transform_1(%arg0: i32, %arg1: i32) -> (i32, i32) {
    %c0_i32 = arith.constant 0 : i32
    %c0_i32_0 = arith.constant 0 : i32
    %c0_i32_1 = arith.constant 0 : i32
    return %c0_i32, %c0_i32_0 : i32, i32
  }
  func.func @transform_2(%arg0: i32, %arg1: i32) -> (i32, i32, i32) {
    %c0_i32 = arith.constant 0 : i32
    %c0_i32_0 = arith.constant 0 : i32
    return %arg0, %arg1, %c0_i32 : i32, i32, i32
  }
}

</mosaic_0001>

<llo_original>
// kernel: tpu_custom_call.1
$region0: #{tpu_custom_call.1}
  #allocation0 [shape = 'u32[]', space=smem, size = 0x4, offset = 0x4, fixed_abs, tag = 'smem constant byte address 0x4 - core index']
  #allocation1 [shape = 'u32[144,128]{1,0:T(1,128)}', space=vmem, size = 0x12000, scoped, tag = 'internal scratch']
  %s0 = inlined_call_operand.hbm [shape: f32[2,8,32], index: 0, kind: input, shape index: {}]
  %s1 = inlined_call_operand.hbm [shape: f32[32,128], index: 1, kind: input, shape index: {}]
  %s2 = inlined_call_operand.hbm [shape: f32[2,8,128], index: 2, kind: output, shape index: {}]
  %s3 = sld [smem:[#allocation0]]
  $region49: #{tpu_custom_call.1} parent=0
    _
  %s5 = ssub.s32 1, %s3
  %s6 = scalar_select 0, %s5, %s3
  $region1: #{tpu_custom_call.1} parent=0
    #allocation2 [shape = 'u8[8192]{0}', space=vmem, size = 0x2000, scoped, tag = 'input window, operand 0']
    #allocation3 [shape = 's32[2]{0}', space=sflag, size = 0x8, scoped, tag = 'scoped memory for tpu_custom_call.1']
    #allocation4 [shape = 's32[2]{0}', space=sflag, size = 0x8, scoped, tag = 'scoped memory for tpu_custom_call.1']
    #allocation5 [shape = 'u8[16384]{0}', space=vmem, size = 0x4000, scoped, tag = 'input window, operand 1, single buffered']
    #allocation6 [shape = 's32[1]{0}', space=sflag, size = 0x4, scoped, tag = 'scoped memory for tpu_custom_call.1']
    #allocation7 [shape = 'u8[8192]{0}', space=vmem, size = 0x2000, scoped, tag = 'output window, operand 0']
    %7 = vsyncpa [#allocation3], 0
    %s8 = scalar_lea.sflag [#allocation3], 1
    %9 = vsyncpa %s8, 0
    %10 = vsyncpa [#allocation6], 0
    %11 = vsyncpa [#allocation4], 0
    %s12 = scalar_lea.sflag [#allocation4], 1
    %13 = vsyncpa %s12, 0
    loop: start=0, step=1, limit=4
    $region2: #{tpu_custom_call.1} parent=1 // loop_pre_header
      _
    $region3: #{tpu_custom_call.1} parent=1 // loop_header
      %s15 = sphi 0, %s19
      %p16 = scmp.ge.s32.totalorder %s15, 4
      %s22 = sphi 0, %s34
      %s23 = sphi 0, %s30
      %s24 = sphi 0, %s22
      %s25 = sphi 0, %s23
      %s26 = sphi 0, %s24
      %s27 = sphi 0, %s25
      %s39 = sphi 0, %s41
      %s42 = sphi 0, %s39
      %s43 = sphi 0, %s42
      %s59 = sphi 0, %s43
      %s63 = sphi 0, %s63
      %s65 = sphi 0, %s63
      %s66 = sphi 0, %s65
      %s80 = sphi 0, %s66
      %s88 = sphi 0, %s90
      %s91 = sphi 0, %s88
      %s92 = sphi 0, %s91
      %s108 = sphi 0, %s92
    $region4: #{tpu_custom_call.1} parent=1 // loop_header_branch
      %18 = sbr.rel (%p16) target = $region8
    $region5: #{tpu_custom_call.1} parent=1 // loop_body
      %s20 = ssub.s32 %s15, 1
      %s21 = ssub.s32 %s15, 2
      %s28 = sadd.s32 1, %s23
      %p29 = scmp.ge.s32.totalorder %s28, 1
      %s30 = scalar_select %p29, 0, %s28
      %s31 = sadd.s32 1, %s22
      %s32 = scalar_select %p29, %s31, %s22
      %p33 = scmp.ge.s32.totalorder %s32, 2
      %s34 = scalar_select %p33, 0, %s32
      %s35 = ssub.s32 %s22, %s34
      %s36 = ssub.s32 %s23, %s30
      %s37 = sor.u32 %s35, %s36
      %p38 = scmp.eq.s32.totalorder %s37, 0
      %s40 = sadd.s32 %s39, 1
      %s41 = scalar_select %p38, %s39, %s40
      %p44 = pneg %p38
      %p45 = scmp.eq.s32.totalorder %s15, 1
      %p46 = por %p44, %p45
      %p47 = scmp.ne.s32.totalorder %s39, %s42
      %p48 = scmp.eq.s32.totalorder %s15, 0
      %p49 = por %p47, %p48
      %p50 = scmp.ne.s32.totalorder %s39, %s42
      %p51 = scmp.eq.s32.totalorder %s20, 1
      %p52 = por %p50, %p51
      %p53 = scmp.ne.s32.totalorder %s42, %s43
      %p54 = scmp.eq.s32.totalorder %s20, 0
      %p55 = por %p53, %p54
      %p56 = scmp.ne.s32.totalorder %s42, %s43
      %p57 = scmp.eq.s32.totalorder %s21, 1
      %p58 = por %p56, %p57
      %p60 = scmp.ne.s32.totalorder %s43, %s59
      %p61 = scmp.eq.s32.totalorder %s21, 0
      %p62 = por %p60, %p61
      %s64 = sadd.s32 %s63, 1
      %p67 = scmp.eq.s32.totalorder %s15, 1
      %p68 = scmp.ne.s32.totalorder %s63, %s65
      %p69 = scmp.eq.s32.totalorder %s15, 0
      %p70 = por %p68, %p69
      %p71 = scmp.ne.s32.totalorder %s63, %s65
      %p72 = scmp.eq.s32.totalorder %s20, 1
      %p73 = por %p71, %p72
      %p74 = scmp.ne.s32.totalorder %s65, %s66
      %p75 = scmp.eq.s32.totalorder %s20, 0
      %p76 = por %p74, %p75
      %p77 = scmp.ne.s32.totalorder %s65, %s66
      %p78 = scmp.eq.s32.totalorder %s21, 1
      %p79 = por %p77, %p78
      %p81 = scmp.ne.s32.totalorder %s66, %s80
      %p82 = scmp.eq.s32.totalorder %s21, 0
      %p83 = por %p81, %p82
      %s84 = ssub.s32 %s22, %s34
      %s85 = ssub.s32 %s23, %s30
      %s86 = sor.u32 %s84, %s85
      %p87 = scmp.eq.s32.totalorder %s86, 0
      %s89 = sadd.s32 %s88, 1
      %s90 = scalar_select %p87, %s88, %s89
      %p93 = pneg %p87
      %p94 = scmp.eq.s32.totalorder %s15, 1
      %p95 = por %p93, %p94
      %p96 = scmp.ne.s32.totalorder %s88, %s91
      %p97 = scmp.eq.s32.totalorder %s15, 0
      %p98 = por %p96, %p97
      %p99 = scmp.ne.s32.totalorder %s88, %s91
      %p100 = scmp.eq.s32.totalorder %s20, 1
      %p101 = por %p99, %p100
      %p102 = scmp.ne.s32.totalorder %s91, %s92
      %p103 = scmp.eq.s32.totalorder %s20, 0
      %p104 = por %p102, %p103
      %p105 = scmp.ne.s32.totalorder %s91, %s92
      %p106 = scmp.eq.s32.totalorder %s21, 1
      %p107 = por %p105, %p106
      %p109 = scmp.ne.s32.totalorder %s92, %s108
      %p110 = scmp.eq.s32.totalorder %s21, 0
      %p111 = por %p109, %p110
      %p112 = scmp.le.s32.totalorder 1, %s15
      %p113 = scmp.lt.s32.totalorder %s15, 3
      %p114 = pnand %p112, %p113
      %p115 = pneg %p114
      // Predicated region
      $region9: #{tpu_custom_call.1} parent=5 // pred_check
        _
      $region10: #{tpu_custom_call.1} parent=5 // pred_check_branch
        %117 = sbr.rel (%p114) target = $region12
      $region11: #{tpu_custom_call.1} parent=5 // pred_region
        %s118 = ssub.s32 %s15, 1
        // Predicated region
        $region13: #{tpu_custom_call.1} parent=11 // pred_check
          %p119 = pneg %p76
        $region14: #{tpu_custom_call.1} parent=11 // pred_check_branch
          %121 = sbr.rel (%p119) target = $region16
        $region15: #{tpu_custom_call.1} parent=11 // pred_region
          %s123 = ssub.s32 512, 512
          %124 = vsyncadd [#allocation6], %s123
          %s125 = sshll.u32 [#allocation5], 4
          %s126 = int_to_ptr.vmem [resolvable:$true] %s125
          %131 = dma.hbm_to_vmem [thread:$0]  %s1, 512, %s126, [#allocation6], 128, 128, 8
        $region16: #{tpu_custom_call.1} parent=11 // pred_fallthru
          _
      $region12: #{tpu_custom_call.1} parent=5 // pred_fallthru
        _
      %p132 = scmp.lt.s32.totalorder %s15, 2
      // Predicated region
      $region17: #{tpu_custom_call.1} parent=5 // pred_check
        %p133 = pneg %p132
      $region18: #{tpu_custom_call.1} parent=5 // pred_check_branch
        %135 = sbr.rel (%p133) target = $region20
      $region19: #{tpu_custom_call.1} parent=5 // pred_region
        // Predicated region
        $region21: #{tpu_custom_call.1} parent=19 // pred_check
          %p136 = pneg %p49
        $region22: #{tpu_custom_call.1} parent=19 // pred_check_branch
          %138 = sbr.rel (%p136) target = $region24
        $region23: #{tpu_custom_call.1} parent=19 // pred_region
          %s139 = sand.u32 %s39, 1
          %s140 = scalar_lea.sflag [#allocation3], %s139
          %s141 = sand.u32 %s39, 1
          %s142 = smul.addr %s141, 8
          %s143 = scalar_lea.vmem [#allocation2], %s142
          %s145 = ssub.s32 128, 128
          %146 = vsyncadd %s140, %s145
          %s147 = sadd.s32 %s23, %s22
          %s148 = smul.addr %s147, 128
          %s149 = scalar_lea.hbm %s0, %s148
          %s151 = sshll.u32 %s143, 4
          %s152 = int_to_ptr.vmem [resolvable:$true] %s151
          %154 = dma.hbm_to_vmem [thread:$0]  %s149, 128, %s152, %s140
        $region24: #{tpu_custom_call.1} parent=19 // pred_fallthru
          _
      $region20: #{tpu_custom_call.1} parent=5 // pred_fallthru
        _
      %p155 = scmp.le.s32.totalorder 1, %s15
      %p156 = scmp.lt.s32.totalorder %s15, 3
      %p157 = pnand %p155, %p156
      %p158 = pneg %p157
      // Predicated region
      $region25: #{tpu_custom_call.1} parent=5 // pred_check
        _
      $region26: #{tpu_custom_call.1} parent=5 // pred_check_branch
        %160 = sbr.rel (%p157) target = $region28
      $region27: #{tpu_custom_call.1} parent=5 // pred_region
        %s161 = ssub.s32 %s15, 1
        %s162 = sand.u32 %s42, 1
        %s163 = scalar_lea.sflag [#allocation3], %s162
        %s164 = sand.u32 %s42, 1
        %s165 = smul.addr %s164, 8
        %s166 = scalar_lea.vmem [#allocation2], %s165
        // Predicated region
        $region29: #{tpu_custom_call.1} parent=27 // pred_check
          %p167 = pneg %p55
        $region30: #{tpu_custom_call.1} parent=27 // pred_check_branch
          %169 = sbr.rel (%p167) target = $region32
        $region31: #{tpu_custom_call.1} parent=27 // pred_region
          %170 = dma.done %s163, 128
        $region32: #{tpu_custom_call.1} parent=27 // pred_fallthru
          _
        // Predicated region
        $region33: #{tpu_custom_call.1} parent=27 // pred_check
          %p171 = pneg %p76
        $region34: #{tpu_custom_call.1} parent=27 // pred_check_branch
          %173 = sbr.rel (%p171) target = $region36
        $region35: #{tpu_custom_call.1} parent=27 // pred_region
          %174 = dma.done [#allocation6], 512
        $region36: #{tpu_custom_call.1} parent=27 // pred_fallthru
          _
        %s175 = sand.u32 %s42, 1
        %s176 = scalar_lea.sflag [#allocation3], %s175
        %s177 = sand.u32 %s42, 1
        %s178 = smul.addr %s177, 8
        %s179 = scalar_lea.vmem [#allocation2], %s178
        %p180 = pneg %p55
        %p181 = pneg %p52
        %p182 = pneg %p76
        %p183 = pneg %p73
        %p184 = pneg %p104
        %p185 = pneg %p101
        %s186 = sand.u32 %s91, 1
        %s187 = scalar_lea.sflag [#allocation4], %s186
        %s188 = sand.u32 %s91, 1
        %s189 = smul.addr %s188, 8
        %s190 = scalar_lea.vmem [#allocation7], %s189
        %v191 = vld [vmem:[%s166] sm:$0xff]
        %v192 = vld [vmem:[#allocation5] sm:$0xff]
        %v193 = vld [vmem:[#allocation5 + $0x8] sm:$0xff]
        %v194 = vld [vmem:[#allocation5 + $0x10] sm:$0xff]
        %v195 = vld [vmem:[#allocation5 + $0x18] sm:$0xff]
        %vm196 = vcmask 261120
        %v198 = vsel %vm196, %v191, 0
        %200 = vmatprep.subr.mxu0 0.0
        %201 = vmatpush1.msra.mxu0 0.0
        %202 = vmatprep.subr.mxu0 0.0
        %203 = vmatpush1.msra.mxu0 0.0
        %204 = vmatprep.subr.mxu0 0.0
        %205 = vmatpush1.msra.mxu0 0.0
        %206 = vmatprep.subr.mxu0 0.0
        %207 = vmatpush1.msra.mxu0 0.0
        %208 = vmatprep.subr.mxu0 0.0
        %209 = vmatpush1.msra.mxu0 0.0
        %210 = vmatprep.subr.mxu0 0.0
        %211 = vmatpush1.msra.mxu0 0.0
        %212 = vmatprep.subr.mxu0 0.0
        %213 = vmatpush1.msra.mxu0 0.0
        %214 = vmatprep.subr.mxu0 0.0
        %215 = vmatpush1.msra.mxu0 0.0
        %216 = vmatprep.subr.mxu0 0.0
        %217 = vmatpush1.msra.mxu0 0.0
        %218 = vmatprep.subr.mxu0 0.0
        %219 = vmatpush1.msra.mxu0 0.0
        %220 = vmatprep.subr.mxu0 0.0
        %221 = vmatpush1.msra.mxu0 0.0
        %222 = vmatprep.subr.mxu0 0.0
        %223 = vmatpush1.msra.mxu0 0.0
        %224 = vmatprep.subr.mxu0 0.0
        %225 = vmatpush1.msra.mxu0 %v195
        %226 = vmatprep.subr.mxu0 0.0
        %227 = vmatpush1.msra.mxu0 %v194
        %228 = vmatprep.subr.mxu0 0.0
        %229 = vmatpush1.msra.mxu0 %v193
        %230 = vmatprep.subr.mxu0 0.0
        %231 = vmatpush1.msra.mxu0 %v192
        %232 = vmatprep.subr.mxu0 0.0
        %233 = vmatpush2.msra.mxu0 0.0
        %234 = vmatprep.subr.mxu0 0.0
        %235 = vmatpush2.msra.mxu0 0.0
        %236 = vmatprep.subr.mxu0 0.0
        %237 = vmatpush2.msra.mxu0 0.0
        %238 = vmatprep.subr.mxu0 0.0
        %239 = vmatpush2.msra.mxu0 0.0
        %240 = vmatprep.subr.mxu0 0.0
        %241 = vmatpush2.msra.mxu0 0.0
        %242 = vmatprep.subr.mxu0 0.0
        %243 = vmatpush2.msra.mxu0 0.0
        %244 = vmatprep.subr.mxu0 0.0
        %245 = vmatpush2.msra.mxu0 0.0
        %246 = vmatprep.subr.mxu0 0.0
        %247 = vmatpush2.msra.mxu0 0.0
        %248 = vmatprep.subr.mxu0 0.0
        %249 = vmatpush2.msra.mxu0 0.0
        %250 = vmatprep.subr.mxu0 0.0
        %251 = vmatpush2.msra.mxu0 0.0
        %252 = vmatprep.subr.mxu0 0.0
        %253 = vmatpush2.msra.mxu0 0.0
        %254 = vmatprep.subr.mxu0 0.0
        %255 = vmatpush2.msra.mxu0 0.0
        %256 = vmatprep.subr.mxu0 0.0
        %257 = vmatpush2.msra.mxu0 0.0
        %258 = vmatprep.subr.mxu0 0.0
        %259 = vmatpush2.msra.mxu0 0.0
        %260 = vmatprep.subr.mxu0 0.0
        %261 = vmatpush2.msra.mxu0 0.0
        %262 = vmatprep.subr.mxu0 0.0
        %263 = vmatpush2.msra.mxu0 0.0
        %264 = vmatprep.mubr.f32.mxu0 0.0
        %265 = vmatmul.mubr.f32.gmra.mxu0 %v198
        %v266 = vpop.f32.mrf.mxu0
        %v267 = vadd.f32 0.0, %v266
        %v268 = vpop.f32.mrf.mxu0
        %269 = vdwg.mxu0
        %270 = vst [vmem:[%s190] sm:$0xff] %v267
        %s271 = sand.u32 %s91, 1
        %s272 = scalar_lea.sflag [#allocation4], %s271
        %s273 = sand.u32 %s91, 1
        %s274 = smul.addr %s273, 8
        %s275 = scalar_lea.vmem [#allocation7], %s274
        // Predicated region
        $region37: #{tpu_custom_call.1} parent=27 // pred_check
          %p276 = pneg %p101
        $region38: #{tpu_custom_call.1} parent=27 // pred_check_branch
          %278 = sbr.rel (%p276) target = $region40
        $region39: #{tpu_custom_call.1} parent=27 // pred_region
          %s280 = ssub.s32 128, 128
          %281 = vsyncadd %s272, %s280
          %s282 = sadd.s32 %s25, %s24
          %s283 = smul.addr %s282, 128
          %s284 = scalar_lea.hbm %s2, %s283
          %s286 = sshll.u32 %s275, 4
          %s287 = int_to_ptr.vmem [resolvable:$true] %s286
          %289 = dma.vmem_to_hbm [thread:$0]  %s287, 128, %s284, %s272
        $region40: #{tpu_custom_call.1} parent=27 // pred_fallthru
          _
      $region28: #{tpu_custom_call.1} parent=5 // pred_fallthru
        _
      %p290 = scmp.le.s32.totalorder 2, %s15
      // Predicated region
      $region41: #{tpu_custom_call.1} parent=5 // pred_check
        %p291 = pneg %p290
      $region42: #{tpu_custom_call.1} parent=5 // pred_check_branch
        %293 = sbr.rel (%p291) target = $region44
      $region43: #{tpu_custom_call.1} parent=5 // pred_region
        %s294 = ssub.s32 %s15, 2
        // Predicated region
        $region45: #{tpu_custom_call.1} parent=43 // pred_check
          %p295 = pneg %p107
        $region46: #{tpu_custom_call.1} parent=43 // pred_check_branch
          %297 = sbr.rel (%p295) target = $region48
        $region47: #{tpu_custom_call.1} parent=43 // pred_region
          %s298 = sand.u32 %s92, 1
          %s299 = scalar_lea.sflag [#allocation4], %s298
          %s300 = sand.u32 %s92, 1
          %s301 = smul.addr %s300, 8
          %s302 = scalar_lea.vmem [#allocation7], %s301
          %303 = dma.done %s299, 128
        $region48: #{tpu_custom_call.1} parent=43 // pred_fallthru
          _
      $region44: #{tpu_custom_call.1} parent=5 // pred_fallthru
        _
    $region6: #{tpu_custom_call.1} parent=1 // loop_footer
      %s19 = sadd.s32 1, %s15
    $region7: #{tpu_custom_call.1} parent=1 // loop_footer_branch
      %14 = sbr.rel target = $region3
    $region8: #{tpu_custom_call.1} parent=1 // loop_exit
      _
    %304 = vsyncpa [#allocation3], 1
    %s305 = scalar_lea.sflag [#allocation3], 1
    %306 = vsyncpa %s305, 1
    %307 = vsyncpa [#allocation6], 1
    %308 = vsyncpa [#allocation4], 1
    %s309 = scalar_lea.sflag [#allocation4], 1
    %310 = vsyncpa %s309, 1

</llo_original>
